<compile_context>
chip_gen: v7x
topology: tpu7x:2x2x1
jax: 0.10.0
libtpu: 0.0.40
codegen_flags: <defaults>
</compile_context>

<pallas_src>
import functools

import jax
import jax.numpy as jnp
from jax.experimental import pallas as pl
from jax.experimental.pallas import tpu as pltpu


def mlp_kernel(x_ref, w1_ref, w2_ref, w3_ref, o_ref):
    # layer 1: relu(x @ w1)  -- bf16 operands, f32 accumulation on the MXU
    h = jnp.dot(x_ref[...], w1_ref[...], preferred_element_type=jnp.float32)
    h = jnp.maximum(h, 0.0)
    # layer 2: relu(h @ w2)
    h = jnp.dot(h.astype(jnp.bfloat16), w2_ref[...],
                preferred_element_type=jnp.float32)
    h = jnp.maximum(h, 0.0)
    # layer 3: h @ w3 (no activation)
    out = jnp.dot(h.astype(jnp.bfloat16), w3_ref[...],
                  preferred_element_type=jnp.float32)
    o_ref[...] = out.astype(o_ref.dtype)


def _round_up(n, m):
    return ((n + m - 1) // m) * m


@functools.partial(jax.jit, static_argnames=("tm",))
def linear_mlp(x, w_in, w_mid, w_out, *, tm=128):
    """Pallas TPU implementation of the GMVAE `linear` module forward pass.

    x:     [batch, d_in]           (float32)
    w_in:  [d_hid, d_in]           (PyTorch F.linear layout)
    w_mid: [d_hid, d_hid]
    w_out: [d_out, d_hid]
    returns [batch, d_out] float32
    """
    batch, d_in = x.shape
    d_hid = w_in.shape[0]
    d_out = w_out.shape[0]

    # Pad everything to lane-dense multiples of 128 (exact: zero pads through
    # ReLU contribute nothing; padded output columns are sliced off below).
    d_in_p = _round_up(d_in, 128)
    d_hid_p = _round_up(d_hid, 128)
    d_out_p = _round_up(d_out, 128)
    batch_p = _round_up(batch, tm)

    # Pre-transpose to [in, out] so the kernel computes x @ W directly,
    # and cast MXU operands to bf16 (f32 accumulation inside the kernel).
    x_p = jnp.pad(x, ((0, batch_p - batch), (0, d_in_p - d_in))).astype(jnp.bfloat16)
    w1 = jnp.pad(w_in.T, ((0, d_in_p - d_in), (0, d_hid_p - d_hid))).astype(jnp.bfloat16)
    w2 = jnp.pad(w_mid.T, ((0, d_hid_p - d_hid), (0, d_hid_p - d_hid))).astype(jnp.bfloat16)
    w3 = jnp.pad(w_out.T, ((0, d_hid_p - d_hid), (0, d_out_p - d_out))).astype(jnp.bfloat16)

    grid = (batch_p // tm,)

    flops = 2 * batch_p * (d_in_p * d_hid_p + d_hid_p * d_hid_p + d_hid_p * d_out_p)
    bytes_accessed = (x_p.size * 2 + w1.size * 2 + w2.size * 2 + w3.size * 2
                      + batch_p * d_out_p * 4)

    out_p = pl.pallas_call(
        mlp_kernel,
        out_shape=jax.ShapeDtypeStruct((batch_p, d_out_p), jnp.float32),
        grid=grid,
        in_specs=[
            pl.BlockSpec((tm, d_in_p), lambda i: (i, 0)),       # x tile
            pl.BlockSpec((d_in_p, d_hid_p), lambda i: (0, 0)),  # w1 resident
            pl.BlockSpec((d_hid_p, d_hid_p), lambda i: (0, 0)),  # w2 resident
            pl.BlockSpec((d_hid_p, d_out_p), lambda i: (0, 0)),  # w3 resident
        ],
        out_specs=pl.BlockSpec((tm, d_out_p), lambda i: (i, 0)),
        compiler_params=pltpu.CompilerParams(
            dimension_semantics=("parallel",)),
        cost_estimate=pl.CostEstimate(
            flops=flops, transcendentals=0, bytes_accessed=bytes_accessed),
    )(x_p, w1, w2, w3)

    return out_p[:batch, :d_out]


def init_params(key, d_in, d_out, d_hid=100):
    k1, k2, k3 = jax.random.split(key, 3)
    # matches nn.Parameter(t.randn(d_hid, d_in) / 10) etc.
    w_in = jax.random.normal(k1, (d_hid, d_in), jnp.float32) / 10.0
    w_mid = jax.random.normal(k2, (d_hid, d_hid), jnp.float32) / 10.0
    w_out = jax.random.normal(k3, (d_out, d_hid), jnp.float32) / 10.0
    return w_in, w_mid, w_out


def reference(x, w_in, w_mid, w_out):
    h = jnp.maximum(x @ w_in.T, 0.0)
    h = jnp.maximum(h @ w_mid.T, 0.0)
    return h @ w_out.T


if __name__ == "__main__":
    key = jax.random.PRNGKey(0)
    k_x, k_p = jax.random.split(key)

    batch, d_in, d_out, d_hid = 8, 32, 16, 100
    x = jax.random.normal(k_x, (batch, d_in), jnp.float32)
    w_in, w_mid, w_out = init_params(k_p, d_in, d_out, d_hid)

    y = linear_mlp(x, w_in, w_mid, w_out)
    y = jax.block_until_ready(y)

    y_ref = reference(x, w_in, w_mid, w_out)
    assert y.shape == (batch, d_out)
    # bf16 MXU inputs with f32 accumulation -> loose tolerance vs f32 reference.
    assert jnp.allclose(y, y_ref, atol=5e-2, rtol=5e-2), (
        float(jnp.max(jnp.abs(y - y_ref))))

    print("KERNEL_OK")
</pallas_src>

<mosaic_0001>
module attributes {stable_mosaic.version = 11 : i64} {
  func.func @mlp_kernel(%arg0: i32, %arg1: memref<128x128xbf16, #tpu.memory_space<vmem>>, %arg2: memref<128x128xbf16, #tpu.memory_space<vmem>>, %arg3: memref<128x128xbf16, #tpu.memory_space<vmem>>, %arg4: memref<128x128xbf16, #tpu.memory_space<vmem>>, %arg5: memref<128x128xf32, #tpu.memory_space<vmem>>) attributes {dimension_semantics = [#tpu.dimension_semantics<parallel>], iteration_bounds = array<i64: 1>, scalar_prefetch = 0 : i64, scratch_operands = 0 : i64, tpu.core_type = #tpu.core_type<tc>, window_params = [{transform_indices = @transform_0, window_bounds = array<i64: 128, 128>}, {pipeline_mode = #tpu.pipeline_mode<synchronous>, transform_indices = @transform_1, window_bounds = array<i64: 128, 128>}, {pipeline_mode = #tpu.pipeline_mode<synchronous>, transform_indices = @transform_2, window_bounds = array<i64: 128, 128>}, {pipeline_mode = #tpu.pipeline_mode<synchronous>, transform_indices = @transform_3, window_bounds = array<i64: 128, 128>}, {transform_indices = @transform_4, window_bounds = array<i64: 128, 128>}]} {
    %c0 = arith.constant 0 : index
    %c0_0 = arith.constant 0 : index
    %0 = vector.load %arg1[%c0, %c0_0] : memref<128x128xbf16, #tpu.memory_space<vmem>>, vector<128x128xbf16>
    %c0_1 = arith.constant 0 : index
    %c0_2 = arith.constant 0 : index
    %1 = vector.load %arg2[%c0_1, %c0_2] : memref<128x128xbf16, #tpu.memory_space<vmem>>, vector<128x128xbf16>
    %cst = arith.constant dense<0.000000e+00> : vector<128x128xf32>
    %2 = tpu.matmul %0, %1, %cst {dimension_numbers = #tpu.dot_dimension_numbers<[1], [0], [0], [1], [0, 0, 1, 1], [], []>} : vector<128x128xbf16>, vector<128x128xbf16>, vector<128x128xf32> -> vector<128x128xf32>
    %cst_3 = arith.constant 0.000000e+00 : f32
    %3 = vector.broadcast %cst_3 : f32 to vector<128x128xf32>
    %4 = arith.maximumf %2, %3 : vector<128x128xf32>
    %5 = arith.truncf %4 : vector<128x128xf32> to vector<128x128xbf16>
    %c0_4 = arith.constant 0 : index
    %c0_5 = arith.constant 0 : index
    %6 = vector.load %arg3[%c0_4, %c0_5] : memref<128x128xbf16, #tpu.memory_space<vmem>>, vector<128x128xbf16>
    %cst_6 = arith.constant dense<0.000000e+00> : vector<128x128xf32>
    %7 = tpu.matmul %5, %6, %cst_6 {dimension_numbers = #tpu.dot_dimension_numbers<[1], [0], [0], [1], [0, 0, 1, 1], [], []>} : vector<128x128xbf16>, vector<128x128xbf16>, vector<128x128xf32> -> vector<128x128xf32>
    %cst_7 = arith.constant 0.000000e+00 : f32
    %8 = vector.broadcast %cst_7 : f32 to vector<128x128xf32>
    %9 = arith.maximumf %7, %8 : vector<128x128xf32>
    %10 = arith.truncf %9 : vector<128x128xf32> to vector<128x128xbf16>
    %c0_8 = arith.constant 0 : index
    %c0_9 = arith.constant 0 : index
    %11 = vector.load %arg4[%c0_8, %c0_9] : memref<128x128xbf16, #tpu.memory_space<vmem>>, vector<128x128xbf16>
    %cst_10 = arith.constant dense<0.000000e+00> : vector<128x128xf32>
    %12 = tpu.matmul %10, %11, %cst_10 {dimension_numbers = #tpu.dot_dimension_numbers<[1], [0], [0], [1], [0, 0, 1, 1], [], []>} : vector<128x128xbf16>, vector<128x128xbf16>, vector<128x128xf32> -> vector<128x128xf32>
    %c0_11 = arith.constant 0 : index
    %c0_12 = arith.constant 0 : index
    %13 = vector.load %arg5[%c0_11, %c0_12] : memref<128x128xf32, #tpu.memory_space<vmem>>, vector<128x128xf32>
    tpu.vector_store %arg5[%c0_11, %c0_12], %12 {strides = array<i32>} : memref<128x128xf32, #tpu.memory_space<vmem>>, vector<128x128xf32>,
    return
  }
  func.func @transform_0(%arg0: i32) -> (i32, i32) {
    %c0_i32 = arith.constant 0 : i32
    %c0_i32_0 = arith.constant 0 : i32
    return %arg0, %c0_i32 : i32, i32
  }
  func.func @transform_1(%arg0: i32) -> (i32, i32) {
    %c0_i32 = arith.constant 0 : i32
    %c0_i32_0 = arith.constant 0 : i32
    %c0_i32_1 = arith.constant 0 : i32
    return %c0_i32, %c0_i32_0 : i32, i32
  }
  func.func @transform_2(%arg0: i32) -> (i32, i32) {
    %c0_i32 = arith.constant 0 : i32
    %c0_i32_0 = arith.constant 0 : i32
    %c0_i32_1 = arith.constant 0 : i32
    return %c0_i32, %c0_i32_0 : i32, i32
  }
  func.func @transform_3(%arg0: i32) -> (i32, i32) {
    %c0_i32 = arith.constant 0 : i32
    %c0_i32_0 = arith.constant 0 : i32
    %c0_i32_1 = arith.constant 0 : i32
    return %c0_i32, %c0_i32_0 : i32, i32
  }
  func.func @transform_4(%arg0: i32) -> (i32, i32) {
    %c0_i32 = arith.constant 0 : i32
    %c0_i32_0 = arith.constant 0 : i32
    return %arg0, %c0_i32 : i32, i32
  }
}

</mosaic_0001>

<llo_original>
// kernel: linear_mlp.1
$region0: #{linear_mlp.1}
  #allocation0 [shape = 'u32[]', space=smem, size = 0x4, offset = 0x4, fixed_abs, tag = 'smem constant byte address 0x4 - core index']
  #allocation1 [shape = 'u32[144,128]{1,0:T(1,128)}', space=vmem, size = 0x12000, scoped, tag = 'internal scratch']
  %s0 = inlined_call_operand.vmem [shape: bf16[128,128], index: 0, kind: input, shape index: {}]
  %s1 = inlined_call_operand.vmem [shape: bf16[128,128], index: 1, kind: input, shape index: {}]
  %s2 = inlined_call_operand.vmem [shape: bf16[128,128], index: 2, kind: input, shape index: {}]
  %s3 = inlined_call_operand.vmem [shape: bf16[128,128], index: 3, kind: input, shape index: {}]
  %s4 = inlined_call_operand.vmem [shape: f32[128,128], index: 4, kind: output, shape index: {}]
  %s5 = sld [smem:[#allocation0]]
  $region26: #{linear_mlp.1} parent=0
    _
  %s7 = ssub.s32 1, %s5
  %s8 = scalar_select 0, %s7, %s5
  // Predicated region
  $region2: #{linear_mlp.1} parent=0 // pred_check
    _
  $region3: #{linear_mlp.1} parent=0 // pred_check_branch
    %10 = sbr.rel (0) target = $region5
  $region4: #{linear_mlp.1} parent=0 // pred_region
    _
  $region5: #{linear_mlp.1} parent=0 // pred_fallthru
    _
  // Predicated region
  $region6: #{linear_mlp.1} parent=0 // pred_check
    _
  $region7: #{linear_mlp.1} parent=0 // pred_check_branch
    %12 = sbr.rel (0) target = $region9
  $region8: #{linear_mlp.1} parent=0 // pred_region
    _
  $region9: #{linear_mlp.1} parent=0 // pred_fallthru
    _
  // Predicated region
  $region10: #{linear_mlp.1} parent=0 // pred_check
    _
  $region11: #{linear_mlp.1} parent=0 // pred_check_branch
    %14 = sbr.rel (0) target = $region13
  $region12: #{linear_mlp.1} parent=0 // pred_region
    _
  $region13: #{linear_mlp.1} parent=0 // pred_fallthru
    _
  // Predicated region
  $region14: #{linear_mlp.1} parent=0 // pred_check
    _
  $region15: #{linear_mlp.1} parent=0 // pred_check_branch
    %16 = sbr.rel (0) target = $region17
  $region16: #{linear_mlp.1} parent=0 // pred_region
    _
  $region17: #{linear_mlp.1} parent=0 // pred_fallthru
    _
  %v18 = vld [vmem:[%s0] sm:$0xf]
  %v19 = vld [vmem:[%s0 + $0x4] sm:$0xf]
  %v20 = vld [vmem:[%s0 + $0x8] sm:$0xf]
  %v21 = vld [vmem:[%s0 + $0xc] sm:$0xf]
  %v22 = vld [vmem:[%s0 + $0x10] sm:$0xf]
  %v23 = vld [vmem:[%s0 + $0x14] sm:$0xf]
  %v24 = vld [vmem:[%s0 + $0x18] sm:$0xf]
  %v25 = vld [vmem:[%s0 + $0x1c] sm:$0xf]
  %v26 = vld [vmem:[%s0 + $0x20] sm:$0xf]
  %v27 = vld [vmem:[%s0 + $0x24] sm:$0xf]
  %v28 = vld [vmem:[%s0 + $0x28] sm:$0xf]
  %v29 = vld [vmem:[%s0 + $0x2c] sm:$0xf]
  %v30 = vld [vmem:[%s0 + $0x30] sm:$0xf]
  %v31 = vld [vmem:[%s0 + $0x34] sm:$0xf]
  %v32 = vld [vmem:[%s0 + $0x38] sm:$0xf]
  %v33 = vld [vmem:[%s0 + $0x3c] sm:$0xf]
  %v34 = vld [vmem:[%s1] sm:$0xf]
  %v35 = vld [vmem:[%s1 + $0x4] sm:$0xf]
  %v36 = vld [vmem:[%s1 + $0x8] sm:$0xf]
  %v37 = vld [vmem:[%s1 + $0xc] sm:$0xf]
  %v38 = vld [vmem:[%s1 + $0x10] sm:$0xf]
  %v39 = vld [vmem:[%s1 + $0x14] sm:$0xf]
  %v40 = vld [vmem:[%s1 + $0x18] sm:$0xf]
  %v41 = vld [vmem:[%s1 + $0x1c] sm:$0xf]
  %v42 = vld [vmem:[%s1 + $0x20] sm:$0xf]
  %v43 = vld [vmem:[%s1 + $0x24] sm:$0xf]
  %v44 = vld [vmem:[%s1 + $0x28] sm:$0xf]
  %v45 = vld [vmem:[%s1 + $0x2c] sm:$0xf]
  %v46 = vld [vmem:[%s1 + $0x30] sm:$0xf]
  %v47 = vld [vmem:[%s1 + $0x34] sm:$0xf]
  %v48 = vld [vmem:[%s1 + $0x38] sm:$0xf]
  %v49 = vld [vmem:[%s1 + $0x3c] sm:$0xf]
  %v66 = vunpack.c.l.b16 %v18
  %v67 = vunpack.c.l.b16 %v19
  %v68 = vunpack.c.l.b16 %v20
  %v69 = vunpack.c.l.b16 %v21
  %v70 = vunpack.c.l.b16 %v22
  %v71 = vunpack.c.l.b16 %v23
  %v72 = vunpack.c.l.b16 %v24
  %v73 = vunpack.c.l.b16 %v25
  %v74 = vunpack.c.l.b16 %v26
  %v75 = vunpack.c.l.b16 %v27
  %v76 = vunpack.c.l.b16 %v28
  %v77 = vunpack.c.l.b16 %v29
  %v78 = vunpack.c.l.b16 %v30
  %v79 = vunpack.c.l.b16 %v31
  %v80 = vunpack.c.l.b16 %v32
  %v81 = vunpack.c.l.b16 %v33
  %v82 = vpack.c.b16 %v67, %v66
  %v83 = vpack.c.b16 %v69, %v68
  %v84 = vpack.c.b16 %v71, %v70
  %v85 = vpack.c.b16 %v73, %v72
  %v86 = vpack.c.b16 %v75, %v74
  %v87 = vpack.c.b16 %v77, %v76
  %v88 = vpack.c.b16 %v79, %v78
  %v89 = vpack.c.b16 %v81, %v80
  %v114 = vunpack.c.l.b16 %v34
  %v115 = vunpack.c.l.b16 %v35
  %v116 = vunpack.c.l.b16 %v36
  %v117 = vunpack.c.l.b16 %v37
  %v118 = vunpack.c.l.b16 %v38
  %v119 = vunpack.c.l.b16 %v39
  %v120 = vunpack.c.l.b16 %v40
  %v121 = vunpack.c.l.b16 %v41
  %v122 = vunpack.c.l.b16 %v42
  %v123 = vunpack.c.l.b16 %v43
  %v124 = vunpack.c.l.b16 %v44
  %v125 = vunpack.c.l.b16 %v45
  %v126 = vunpack.c.l.b16 %v46
  %v127 = vunpack.c.l.b16 %v47
  %v128 = vunpack.c.l.b16 %v48
  %v129 = vunpack.c.l.b16 %v49
  %v130 = vpack.c.b16 %v115, %v114
  %v131 = vpack.c.b16 %v117, %v116
  %v132 = vpack.c.b16 %v119, %v118
  %v133 = vpack.c.b16 %v121, %v120
  %v134 = vpack.c.b16 %v123, %v122
  %v135 = vpack.c.b16 %v125, %v124
  %v136 = vpack.c.b16 %v127, %v126
  %v137 = vpack.c.b16 %v129, %v128
  %146 = vmatprep.subr.bf16.mxu0 0
  %147 = vmatpush1.bf16.msra.mxu0 %v130
  %148 = vmatprep.subr.bf16.mxu0 0
  %149 = vmatpush1.bf16.msra.mxu0 %v131
  %150 = vmatprep.subr.bf16.mxu0 0
  %151 = vmatpush1.bf16.msra.mxu0 %v132
  %152 = vmatprep.subr.bf16.mxu0 0
  %153 = vmatpush1.bf16.msra.mxu0 %v133
  %154 = vmatprep.subr.bf16.mxu0 0
  %155 = vmatpush1.bf16.msra.mxu0 %v134
  %156 = vmatprep.subr.bf16.mxu0 0
  %157 = vmatpush1.bf16.msra.mxu0 %v135
  %158 = vmatprep.subr.bf16.mxu0 0
  %159 = vmatpush1.bf16.msra.mxu0 %v136
  %160 = vmatprep.subr.bf16.mxu0 0
  %161 = vmatpush1.bf16.msra.mxu0 %v137
  %162 = vmatprep.subr.bf16.mxu0 0
  %163 = vmatpush1.bf16.msra.mxu0 0
  %164 = vmatprep.subr.bf16.mxu0 0
  %165 = vmatpush1.bf16.msra.mxu0 0
  %166 = vmatprep.subr.bf16.mxu0 0
  %167 = vmatpush1.bf16.msra.mxu0 0
  %168 = vmatprep.subr.bf16.mxu0 0
  %169 = vmatpush1.bf16.msra.mxu0 0
  %170 = vmatprep.subr.bf16.mxu0 0
  %171 = vmatpush1.bf16.msra.mxu0 0
  %172 = vmatprep.subr.bf16.mxu0 0
  %173 = vmatpush1.bf16.msra.mxu0 0
  %174 = vmatprep.subr.bf16.mxu0 0
  %175 = vmatpush1.bf16.msra.mxu0 0
  %176 = vmatprep.subr.bf16.mxu0 0
  %177 = vmatpush1.bf16.msra.mxu0 0
  %178 = vmatprep.mubr.bf16.mxu0 0
  %179 = vmatmul.mubr.bf16.gmra.mrb[0].mxu0 %v82
  %v180 = vpop.f32.mrb[0].mxu0
  %v181 = vadd.f32 0.0, %v180
  %v182 = vpop.f32.mrb[0].mxu0
  %v183 = vpop.f32.mrb[0].mxu0
  %v184 = vadd.f32 0.0, %v183
  %v185 = vpop.f32.mrb[0].mxu0
  %186 = vmatprep.mubr.bf16.mxu0 0
  %187 = vmatmul.mubr.bf16.gmra.mrb[0].mxu0 %v83
  %v188 = vpop.f32.mrb[0].mxu0
  %v189 = vadd.f32 0.0, %v188
  %v190 = vpop.f32.mrb[0].mxu0
  %v191 = vpop.f32.mrb[0].mxu0
  %v192 = vadd.f32 0.0, %v191
  %v193 = vpop.f32.mrb[0].mxu0
  %194 = vmatprep.mubr.bf16.mxu0 0
  %195 = vmatmul.mubr.bf16.gmra.mrb[0].mxu0 %v84
  %v196 = vpop.f32.mrb[0].mxu0
  %v197 = vadd.f32 0.0, %v196
  %v198 = vpop.f32.mrb[0].mxu0
  %v199 = vpop.f32.mrb[0].mxu0
  %v200 = vadd.f32 0.0, %v199
  %v201 = vpop.f32.mrb[0].mxu0
  %202 = vmatprep.mubr.bf16.mxu0 0
  %203 = vmatmul.mubr.bf16.gmra.mrb[0].mxu0 %v85
  %v204 = vpop.f32.mrb[0].mxu0
  %v205 = vadd.f32 0.0, %v204
  %v206 = vpop.f32.mrb[0].mxu0
  %v207 = vpop.f32.mrb[0].mxu0
  %v208 = vadd.f32 0.0, %v207
  %v209 = vpop.f32.mrb[0].mxu0
  %210 = vmatprep.mubr.bf16.mxu0 0
  %211 = vmatmul.mubr.bf16.gmra.mrb[0].mxu0 %v86
  %v212 = vpop.f32.mrb[0].mxu0
  %v213 = vadd.f32 0.0, %v212
  %v214 = vpop.f32.mrb[0].mxu0
  %v215 = vpop.f32.mrb[0].mxu0
  %v216 = vadd.f32 0.0, %v215
  %v217 = vpop.f32.mrb[0].mxu0
  %218 = vmatprep.mubr.bf16.mxu0 0
  %219 = vmatmul.mubr.bf16.gmra.mrb[0].mxu0 %v87
  %v220 = vpop.f32.mrb[0].mxu0
  %v221 = vadd.f32 0.0, %v220
  %v222 = vpop.f32.mrb[0].mxu0
  %v223 = vpop.f32.mrb[0].mxu0
  %v224 = vadd.f32 0.0, %v223
  %v225 = vpop.f32.mrb[0].mxu0
  %226 = vmatprep.mubr.bf16.mxu0 0
  %227 = vmatmul.mubr.bf16.gmra.mrb[0].mxu0 %v88
  %v228 = vpop.f32.mrb[0].mxu0
  %v229 = vadd.f32 0.0, %v228
  %v230 = vpop.f32.mrb[0].mxu0
  %v231 = vpop.f32.mrb[0].mxu0
  %v232 = vadd.f32 0.0, %v231
  %v233 = vpop.f32.mrb[0].mxu0
  %234 = vmatprep.mubr.bf16.mxu0 0
  %235 = vmatmul.mubr.bf16.gmra.mrb[0].mxu0 %v89
  %v236 = vpop.f32.mrb[0].mxu0
  %v237 = vadd.f32 0.0, %v236
  %v238 = vpop.f32.mrb[0].mxu0
  %v239 = vpop.f32.mrb[0].mxu0
  %v240 = vadd.f32 0.0, %v239
  %v241 = vpop.f32.mrb[0].mxu0
  %242 = vdwg.mxu0
  %v243 = vmax.f32 %v181, 0.0
  %v244 = vmax.f32 %v184, 0.0
  %v245 = vmax.f32 %v189, 0.0
  %v246 = vmax.f32 %v192, 0.0
  %v247 = vmax.f32 %v197, 0.0
  %v248 = vmax.f32 %v200, 0.0
  %v249 = vmax.f32 %v205, 0.0
  %v250 = vmax.f32 %v208, 0.0
  %v251 = vmax.f32 %v213, 0.0
  %v252 = vmax.f32 %v216, 0.0
  %v253 = vmax.f32 %v221, 0.0
  %v254 = vmax.f32 %v224, 0.0
  %v255 = vmax.f32 %v229, 0.0
  %v256 = vmax.f32 %v232, 0.0
  %v257 = vmax.f32 %v237, 0.0
  %v258 = vmax.f32 %v240, 0.0
  %v259 = vpack.c.bf16 %v244, %v243
  %v260 = vpack.c.bf16 %v246, %v245
  %v261 = vpack.c.bf16 %v248, %v247
  %v262 = vpack.c.bf16 %v250, %v249
  %v263 = vpack.c.bf16 %v252, %v251
  %v264 = vpack.c.bf16 %v254, %v253
  %v265 = vpack.c.bf16 %v256, %v255
  %v266 = vpack.c.bf16 %v258, %v257
  %v267 = vld [vmem:[%s2] sm:$0xf]
  %v268 = vld [vmem:[%s2 + $0x4] sm:$0xf]
  %v269 = vld [vmem:[%s2 + $0x8] sm:$0xf]
  %v270 = vld [vmem:[%s2 + $0xc] sm:$0xf]
  %v271 = vld [vmem:[%s2 + $0x10] sm:$0xf]
  %v272 = vld [vmem:[%s2 + $0x14] sm:$0xf]
  %v273 = vld [vmem:[%s2 + $0x18] sm:$0xf]
  %v274 = vld [vmem:[%s2 + $0x1c] sm:$0xf]
  %v275 = vld [vmem:[%s2 + $0x20] sm:$0xf]
  %v276 = vld [vmem:[%s2 + $0x24] sm:$0xf]
  %v277 = vld [vmem:[%s2 + $0x28] sm:$0xf]
  %v278 = vld [vmem:[%s2 + $0x2c] sm:$0xf]
  %v279 = vld [vmem:[%s2 + $0x30] sm:$0xf]
  %v280 = vld [vmem:[%s2 + $0x34] sm:$0xf]
  %v281 = vld [vmem:[%s2 + $0x38] sm:$0xf]
  %v282 = vld [vmem:[%s2 + $0x3c] sm:$0xf]
  %v299 = vunpack.c.l.b16 %v267
  %v300 = vunpack.c.l.b16 %v268
  %v301 = vunpack.c.l.b16 %v269
  %v302 = vunpack.c.l.b16 %v270
  %v303 = vunpack.c.l.b16 %v271
  %v304 = vunpack.c.l.b16 %v272
  %v305 = vunpack.c.l.b16 %v273
  %v306 = vunpack.c.l.b16 %v274
  %v307 = vunpack.c.l.b16 %v275
  %v308 = vunpack.c.l.b16 %v276
  %v309 = vunpack.c.l.b16 %v277
  %v310 = vunpack.c.l.b16 %v278
  %v311 = vunpack.c.l.b16 %v279
  %v312 = vunpack.c.l.b16 %v280
  %v313 = vunpack.c.l.b16 %v281
  %v314 = vunpack.c.l.b16 %v282
  %v315 = vpack.c.b16 %v300, %v299
  %v316 = vpack.c.b16 %v302, %v301
  %v317 = vpack.c.b16 %v304, %v303
  %v318 = vpack.c.b16 %v306, %v305
  %v319 = vpack.c.b16 %v308, %v307
  %v320 = vpack.c.b16 %v310, %v309
  %v321 = vpack.c.b16 %v312, %v311
  %v322 = vpack.c.b16 %v314, %v313
  %331 = vmatprep.subr.bf16.mxu0 0
  %332 = vmatpush1.bf16.msra.mxu0 %v315
  %333 = vmatprep.subr.bf16.mxu0 0
  %334 = vmatpush1.bf16.msra.mxu0 %v316
  %335 = vmatprep.subr.bf16.mxu0 0
  %336 = vmatpush1.bf16.msra.mxu0 %v317
  %337 = vmatprep.subr.bf16.mxu0 0
  %338 = vmatpush1.bf16.msra.mxu0 %v318
  %339 = vmatprep.subr.bf16.mxu0 0
  %340 = vmatpush1.bf16.msra.mxu0 %v319
  %341 = vmatprep.subr.bf16.mxu0 0
  %342 = vmatpush1.bf16.msra.mxu0 %v320
  %343 = vmatprep.subr.bf16.mxu0 0
  %344 = vmatpush1.bf16.msra.mxu0 %v321
  %345 = vmatprep.subr.bf16.mxu0 0
  %346 = vmatpush1.bf16.msra.mxu0 %v322
  %347 = vmatprep.subr.bf16.mxu0 0
  %348 = vmatpush1.bf16.msra.mxu0 0
  %349 = vmatprep.subr.bf16.mxu0 0
  %350 = vmatpush1.bf16.msra.mxu0 0
  %351 = vmatprep.subr.bf16.mxu0 0
  %352 = vmatpush1.bf16.msra.mxu0 0
  %353 = vmatprep.subr.bf16.mxu0 0
  %354 = vmatpush1.bf16.msra.mxu0 0
  %355 = vmatprep.subr.bf16.mxu0 0
  %356 = vmatpush1.bf16.msra.mxu0 0
  %357 = vmatprep.subr.bf16.mxu0 0
  %358 = vmatpush1.bf16.msra.mxu0 0
  %359 = vmatprep.subr.bf16.mxu0 0
  %360 = vmatpush1.bf16.msra.mxu0 0
  %361 = vmatprep.subr.bf16.mxu0 0
  %362 = vmatpush1.bf16.msra.mxu0 0
  %363 = vmatprep.mubr.bf16.mxu0 0
  %364 = vmatmul.mubr.bf16.gmra.mrb[0].mxu0 %v259
  %v365 = vpop.f32.mrb[0].mxu0
  %v366 = vadd.f32 0.0, %v365
  %v367 = vpop.f32.mrb[0].mxu0
  %v368 = vpop.f32.mrb[0].mxu0
  %v369 = vadd.f32 0.0, %v368
  %v370 = vpop.f32.mrb[0].mxu0
  %371 = vmatprep.mubr.bf16.mxu0 0
  %372 = vmatmul.mubr.bf16.gmra.mrb[0].mxu0 %v260
  %v373 = vpop.f32.mrb[0].mxu0
  %v374 = vadd.f32 0.0, %v373
  %v375 = vpop.f32.mrb[0].mxu0
  %v376 = vpop.f32.mrb[0].mxu0
  %v377 = vadd.f32 0.0, %v376
  %v378 = vpop.f32.mrb[0].mxu0
  %379 = vmatprep.mubr.bf16.mxu0 0
  %380 = vmatmul.mubr.bf16.gmra.mrb[0].mxu0 %v261
  %v381 = vpop.f32.mrb[0].mxu0
  %v382 = vadd.f32 0.0, %v381
  %v383 = vpop.f32.mrb[0].mxu0
  %v384 = vpop.f32.mrb[0].mxu0
  %v385 = vadd.f32 0.0, %v384
  %v386 = vpop.f32.mrb[0].mxu0
  %387 = vmatprep.mubr.bf16.mxu0 0
  %388 = vmatmul.mubr.bf16.gmra.mrb[0].mxu0 %v262
  %v389 = vpop.f32.mrb[0].mxu0
  %v390 = vadd.f32 0.0, %v389
  %v391 = vpop.f32.mrb[0].mxu0
  %v392 = vpop.f32.mrb[0].mxu0
  %v393 = vadd.f32 0.0, %v392
  %v394 = vpop.f32.mrb[0].mxu0
  %395 = vmatprep.mubr.bf16.mxu0 0
  %396 = vmatmul.mubr.bf16.gmra.mrb[0].mxu0 %v263
  %v397 = vpop.f32.mrb[0].mxu0
  %v398 = vadd.f32 0.0, %v397
  %v399 = vpop.f32.mrb[0].mxu0
  %v400 = vpop.f32.mrb[0].mxu0
  %v401 = vadd.f32 0.0, %v400
  %v402 = vpop.f32.mrb[0].mxu0
  %403 = vmatprep.mubr.bf16.mxu0 0
  %404 = vmatmul.mubr.bf16.gmra.mrb[0].mxu0 %v264
  %v405 = vpop.f32.mrb[0].mxu0
  %v406 = vadd.f32 0.0, %v405
  %v407 = vpop.f32.mrb[0].mxu0
  %v408 = vpop.f32.mrb[0].mxu0
  %v409 = vadd.f32 0.0, %v408
  %v410 = vpop.f32.mrb[0].mxu0
  %411 = vmatprep.mubr.bf16.mxu0 0
  %412 = vmatmul.mubr.bf16.gmra.mrb[0].mxu0 %v265
  %v413 = vpop.f32.mrb[0].mxu0
  %v414 = vadd.f32 0.0, %v413
  %v415 = vpop.f32.mrb[0].mxu0
  %v416 = vpop.f32.mrb[0].mxu0
  %v417 = vadd.f32 0.0, %v416
  %v418 = vpop.f32.mrb[0].mxu0
  %419 = vmatprep.mubr.bf16.mxu0 0
  %420 = vmatmul.mubr.bf16.gmra.mrb[0].mxu0 %v266
  %v421 = vpop.f32.mrb[0].mxu0
  %v422 = vadd.f32 0.0, %v421
  %v423 = vpop.f32.mrb[0].mxu0
  %v424 = vpop.f32.mrb[0].mxu0
  %v425 = vadd.f32 0.0, %v424
  %v426 = vpop.f32.mrb[0].mxu0
  %427 = vdwg.mxu0
  %v428 = vmax.f32 %v366, 0.0
  %v429 = vmax.f32 %v369, 0.0
  %v430 = vmax.f32 %v374, 0.0
  %v431 = vmax.f32 %v377, 0.0
  %v432 = vmax.f32 %v382, 0.0
  %v433 = vmax.f32 %v385, 0.0
  %v434 = vmax.f32 %v390, 0.0
  %v435 = vmax.f32 %v393, 0.0
  %v436 = vmax.f32 %v398, 0.0
  %v437 = vmax.f32 %v401, 0.0
  %v438 = vmax.f32 %v406, 0.0
  %v439 = vmax.f32 %v409, 0.0
  %v440 = vmax.f32 %v414, 0.0
  %v441 = vmax.f32 %v417, 0.0
  %v442 = vmax.f32 %v422, 0.0
  %v443 = vmax.f32 %v425, 0.0
  %v444 = vpack.c.bf16 %v429, %v428
  %v445 = vpack.c.bf16 %v431, %v430
  %v446 = vpack.c.bf16 %v433, %v432
  %v447 = vpack.c.bf16 %v435, %v434
  %v448 = vpack.c.bf16 %v437, %v436
  %v449 = vpack.c.bf16 %v439, %v438
  %v450 = vpack.c.bf16 %v441, %v440
  %v451 = vpack.c.bf16 %v443, %v442
  %v452 = vld [vmem:[%s3] sm:$0xf]
  %v453 = vld [vmem:[%s3 + $0x4] sm:$0xf]
  %v454 = vld [vmem:[%s3 + $0x8] sm:$0xf]
  %v455 = vld [vmem:[%s3 + $0xc] sm:$0xf]
  %v456 = vld [vmem:[%s3 + $0x10] sm:$0xf]
  %v457 = vld [vmem:[%s3 + $0x14] sm:$0xf]
  %v458 = vld [vmem:[%s3 + $0x18] sm:$0xf]
  %v459 = vld [vmem:[%s3 + $0x1c] sm:$0xf]
  %v460 = vld [vmem:[%s3 + $0x20] sm:$0xf]
  %v461 = vld [vmem:[%s3 + $0x24] sm:$0xf]
  %v462 = vld [vmem:[%s3 + $0x28] sm:$0xf]
  %v463 = vld [vmem:[%s3 + $0x2c] sm:$0xf]
  %v464 = vld [vmem:[%s3 + $0x30] sm:$0xf]
  %v465 = vld [vmem:[%s3 + $0x34] sm:$0xf]
  %v466 = vld [vmem:[%s3 + $0x38] sm:$0xf]
  %v467 = vld [vmem:[%s3 + $0x3c] sm:$0xf]
  %v484 = vunpack.c.l.b16 %v452
  %v485 = vunpack.c.l.b16 %v453
  %v486 = vunpack.c.l.b16 %v454
  %v487 = vunpack.c.l.b16 %v455
  %v488 = vunpack.c.l.b16 %v456
  %v489 = vunpack.c.l.b16 %v457
  %v490 = vunpack.c.l.b16 %v458
  %v491 = vunpack.c.l.b16 %v459
  %v492 = vunpack.c.l.b16 %v460
  %v493 = vunpack.c.l.b16 %v461
  %v494 = vunpack.c.l.b16 %v462
  %v495 = vunpack.c.l.b16 %v463
  %v496 = vunpack.c.l.b16 %v464
  %v497 = vunpack.c.l.b16 %v465
  %v498 = vunpack.c.l.b16 %v466
  %v499 = vunpack.c.l.b16 %v467
  %v500 = vpack.c.b16 %v485, %v484
  %v501 = vpack.c.b16 %v487, %v486
  %v502 = vpack.c.b16 %v489, %v488
  %v503 = vpack.c.b16 %v491, %v490
  %v504 = vpack.c.b16 %v493, %v492
  %v505 = vpack.c.b16 %v495, %v494
  %v506 = vpack.c.b16 %v497, %v496
  %v507 = vpack.c.b16 %v499, %v498
  %516 = vmatprep.subr.bf16.mxu0 0
  %517 = vmatpush1.bf16.msra.mxu0 %v500
  %518 = vmatprep.subr.bf16.mxu0 0
  %519 = vmatpush1.bf16.msra.mxu0 %v501
  %520 = vmatprep.subr.bf16.mxu0 0
  %521 = vmatpush1.bf16.msra.mxu0 %v502
  %522 = vmatprep.subr.bf16.mxu0 0
  %523 = vmatpush1.bf16.msra.mxu0 %v503
  %524 = vmatprep.subr.bf16.mxu0 0
  %525 = vmatpush1.bf16.msra.mxu0 %v504
  %526 = vmatprep.subr.bf16.mxu0 0
  %527 = vmatpush1.bf16.msra.mxu0 %v505
  %528 = vmatprep.subr.bf16.mxu0 0
  %529 = vmatpush1.bf16.msra.mxu0 %v506
  %530 = vmatprep.subr.bf16.mxu0 0
  %531 = vmatpush1.bf16.msra.mxu0 %v507
  %532 = vmatprep.subr.bf16.mxu0 0
  %533 = vmatpush1.bf16.msra.mxu0 0
  %534 = vmatprep.subr.bf16.mxu0 0
  %535 = vmatpush1.bf16.msra.mxu0 0
  %536 = vmatprep.subr.bf16.mxu0 0
  %537 = vmatpush1.bf16.msra.mxu0 0
  %538 = vmatprep.subr.bf16.mxu0 0
  %539 = vmatpush1.bf16.msra.mxu0 0
  %540 = vmatprep.subr.bf16.mxu0 0
  %541 = vmatpush1.bf16.msra.mxu0 0
  %542 = vmatprep.subr.bf16.mxu0 0
  %543 = vmatpush1.bf16.msra.mxu0 0
  %544 = vmatprep.subr.bf16.mxu0 0
  %545 = vmatpush1.bf16.msra.mxu0 0
  %546 = vmatprep.subr.bf16.mxu0 0
  %547 = vmatpush1.bf16.msra.mxu0 0
  %548 = vmatprep.mubr.bf16.mxu0 0
  %549 = vmatmul.mubr.bf16.gmra.mrb[0].mxu0 %v444
  %v550 = vpop.f32.mrb[0].mxu0
  %v551 = vadd.f32 0.0, %v550
  %v552 = vpop.f32.mrb[0].mxu0
  %v553 = vpop.f32.mrb[0].mxu0
  %v554 = vadd.f32 0.0, %v553
  %v555 = vpop.f32.mrb[0].mxu0
  %556 = vmatprep.mubr.bf16.mxu0 0
  %557 = vmatmul.mubr.bf16.gmra.mrb[0].mxu0 %v445
  %v558 = vpop.f32.mrb[0].mxu0
  %v559 = vadd.f32 0.0, %v558
  %v560 = vpop.f32.mrb[0].mxu0
  %v561 = vpop.f32.mrb[0].mxu0
  %v562 = vadd.f32 0.0, %v561
  %v563 = vpop.f32.mrb[0].mxu0
  %564 = vmatprep.mubr.bf16.mxu0 0
  %565 = vmatmul.mubr.bf16.gmra.mrb[0].mxu0 %v446
  %v566 = vpop.f32.mrb[0].mxu0
  %v567 = vadd.f32 0.0, %v566
  %v568 = vpop.f32.mrb[0].mxu0
  %v569 = vpop.f32.mrb[0].mxu0
  %v570 = vadd.f32 0.0, %v569
  %v571 = vpop.f32.mrb[0].mxu0
  %572 = vmatprep.mubr.bf16.mxu0 0
  %573 = vmatmul.mubr.bf16.gmra.mrb[0].mxu0 %v447
  %v574 = vpop.f32.mrb[0].mxu0
  %v575 = vadd.f32 0.0, %v574
  %v576 = vpop.f32.mrb[0].mxu0
  %v577 = vpop.f32.mrb[0].mxu0
  %v578 = vadd.f32 0.0, %v577
  %v579 = vpop.f32.mrb[0].mxu0
  %580 = vmatprep.mubr.bf16.mxu0 0
  %581 = vmatmul.mubr.bf16.gmra.mrb[0].mxu0 %v448
  %v582 = vpop.f32.mrb[0].mxu0
  %v583 = vadd.f32 0.0, %v582
  %v584 = vpop.f32.mrb[0].mxu0
  %v585 = vpop.f32.mrb[0].mxu0
  %v586 = vadd.f32 0.0, %v585
  %v587 = vpop.f32.mrb[0].mxu0
  %588 = vmatprep.mubr.bf16.mxu0 0
  %589 = vmatmul.mubr.bf16.gmra.mrb[0].mxu0 %v449
  %v590 = vpop.f32.mrb[0].mxu0
  %v591 = vadd.f32 0.0, %v590
  %v592 = vpop.f32.mrb[0].mxu0
  %v593 = vpop.f32.mrb[0].mxu0
  %v594 = vadd.f32 0.0, %v593
  %v595 = vpop.f32.mrb[0].mxu0
  %596 = vmatprep.mubr.bf16.mxu0 0
  %597 = vmatmul.mubr.bf16.gmra.mrb[0].mxu0 %v450
  %v598 = vpop.f32.mrb[0].mxu0
  %v599 = vadd.f32 0.0, %v598
  %v600 = vpop.f32.mrb[0].mxu0
  %v601 = vpop.f32.mrb[0].mxu0
  %v602 = vadd.f32 0.0, %v601
  %v603 = vpop.f32.mrb[0].mxu0
  %604 = vmatprep.mubr.bf16.mxu0 0
  %605 = vmatmul.mubr.bf16.gmra.mrb[0].mxu0 %v451
  %v606 = vpop.f32.mrb[0].mxu0
  %v607 = vadd.f32 0.0, %v606
  %v608 = vpop.f32.mrb[0].mxu0
  %v609 = vpop.f32.mrb[0].mxu0
  %v610 = vadd.f32 0.0, %v609
  %v611 = vpop.f32.mrb[0].mxu0
  %612 = vdwg.mxu0
  %613 = vst [vmem:[%s4] sm:$0xff] %v551
  %614 = vst [vmem:[%s4 + $0x8] sm:$0xff] %v554
  %615 = vst [vmem:[%s4 + $0x10] sm:$0xff] %v559
  %616 = vst [vmem:[%s4 + $0x18] sm:$0xff] %v562
  %617 = vst [vmem:[%s4 + $0x20] sm:$0xff] %v567
  %618 = vst [vmem:[%s4 + $0x28] sm:$0xff] %v570
  %619 = vst [vmem:[%s4 + $0x30] sm:$0xff] %v575
  %620 = vst [vmem:[%s4 + $0x38] sm:$0xff] %v578
  %621 = vst [vmem:[%s4 + $0x40] sm:$0xff] %v583
  %622 = vst [vmem:[%s4 + $0x48] sm:$0xff] %v586
  %623 = vst [vmem:[%s4 + $0x50] sm:$0xff] %v591
  %624 = vst [vmem:[%s4 + $0x58] sm:$0xff] %v594
  %625 = vst [vmem:[%s4 + $0x60] sm:$0xff] %v599
  %626 = vst [vmem:[%s4 + $0x68] sm:$0xff] %v602
  %627 = vst [vmem:[%s4 + $0x70] sm:$0xff] %v607
  %628 = vst [vmem:[%s4 + $0x78] sm:$0xff] %v610
  // Predicated region
  $region18: #{linear_mlp.1} parent=0 // pred_check
    _
  $region19: #{linear_mlp.1} parent=0 // pred_check_branch
    %630 = sbr.rel (0) target = $region21
  $region20: #{linear_mlp.1} parent=0 // pred_region
    _
  $region21: #{linear_mlp.1} parent=0 // pred_fallthru
    _
  // Predicated region
  $region22: #{linear_mlp.1} parent=0 // pred_check
    _
  $region23: #{linear_mlp.1} parent=0 // pred_check_branch
    %632 = sbr.rel (0) target = $region25
  $region24: #{linear_mlp.1} parent=0 // pred_region
    _
  $region25: #{linear_mlp.1} parent=0 // pred_fallthru
    _

</llo_original>
